<compile_context>
chip_gen: v7x
topology: tpu7x:2x2x1
jax: 0.10.0
libtpu: 0.0.40
codegen_flags: <defaults>
</compile_context>

<pallas_src>
import math

import jax
import jax.numpy as jnp
from jax.experimental import pallas as pl
from jax.experimental.pallas import tpu as pltpu

# ---- synthetic ACT_vision_encoder hyper-parameters (args) -------------------
HIDDEN = 32        # args.hidden_dim
STATE_DIM = 8      # qpos dimension
LATENT_DIM = 8     # args.latent_dim (VAE latent; zeros at inference)
C_IN = 3
NUM_CAMS = 2
IMG_H = IMG_W = 16
PATCH = 4                           # stand-in backbone: patchify conv (k=stride=PATCH)
C_BACKBONE = 32                     # stand-in backbone output channels
FEAT_H, FEAT_W = IMG_H // PATCH, IMG_W // PATCH
PATCH_DIM = C_IN * PATCH * PATCH    # 48
K_PAD = 64                          # PATCH_DIM zero-padded to a bf16-friendly K
PACK = 128 // HIDDEN                # tokens packed per lane-dense row (4)


# ---------------------------------------------------------------------------
# Pallas kernel: fused (backbone patchify-conv + ReLU + 1x1 input_proj), all
# operands/outputs lane-dense via 4-token packing + block-diagonal weights.
# ---------------------------------------------------------------------------
def _encoder_kernel(patch_ref, w1_ref, b1_ref, w2_ref, b2_ref, src_ref):
    # backbone patchify-conv (as matmul) + bias + ReLU
    # bf16 operands, f32 MXU accumulation; elementwise chain stays f32 (v5e-safe).
    h = jnp.dot(patch_ref[...], w1_ref[...],
                preferred_element_type=jnp.float32) + b1_ref[...]
    h = jnp.maximum(h, 0.0)
    # 1x1 input_proj conv (as matmul) — lane-dense (16,128) store.
    src_ref[...] = (jnp.dot(h.astype(w2_ref.dtype), w2_ref[...],
                            preferred_element_type=jnp.float32)
                    + b2_ref[...]).astype(src_ref.dtype)


def encoder_fused(patches_packed, w1_bd, b1_t, w2_bd, b2_t):
    m = patches_packed.shape[0]          # packed rows (tokens / PACK)
    n = w2_bd.shape[1]                   # PACK * HIDDEN = 128
    vmem = pl.BlockSpec(memory_space=pltpu.MemorySpace.VMEM)
    # Single block, no grid: every operand resident in VMEM, one up-front DMA.
    return pl.pallas_call(
        _encoder_kernel,
        out_shape=jax.ShapeDtypeStruct((m, n), jnp.float32),
        in_specs=[vmem, vmem, vmem, vmem, vmem],
        out_specs=vmem,
    )(patches_packed, w1_bd, b1_t, w2_bd, b2_t)


# ---------------------------------------------------------------------------
# Glue (plain JAX, fused/constant-folded under jit):
# patch extraction + DETR sinusoidal position embedding
# ---------------------------------------------------------------------------
def patchify(imgs):
    # imgs: [B, num_cams, C, H, W]  (PyTorch NCHW per camera)
    b, nc, c, H, W = imgs.shape
    h, w = H // PATCH, W // PATCH
    x = imgs.reshape(b, nc, c, h, PATCH, w, PATCH)
    x = jnp.transpose(x, (0, 1, 3, 5, 2, 4, 6))      # [b, nc, h, w, c, ph, pw]
    return x.reshape(b * nc * h * w, c * PATCH * PATCH)


def sine_pos_embed(h, w, hidden, temperature=10000.0):
    # PositionEmbeddingSine (normalize=True), output [1, hidden, h, w]
    num_pos_feats = hidden // 2
    eps = 1e-6
    scale = 2.0 * math.pi
    y_embed = jnp.cumsum(jnp.ones((h, w), jnp.float32), axis=0)
    x_embed = jnp.cumsum(jnp.ones((h, w), jnp.float32), axis=1)
    y_embed = y_embed / (y_embed[-1:, :] + eps) * scale
    x_embed = x_embed / (x_embed[:, -1:] + eps) * scale
    dim_t = jnp.arange(num_pos_feats, dtype=jnp.float32)
    dim_t = temperature ** (2.0 * jnp.floor(dim_t / 2.0) / num_pos_feats)
    pos_x = x_embed[:, :, None] / dim_t
    pos_y = y_embed[:, :, None] / dim_t
    pos_x = jnp.stack((jnp.sin(pos_x[:, :, 0::2]), jnp.cos(pos_x[:, :, 1::2])),
                      axis=3).reshape(h, w, -1)
    pos_y = jnp.stack((jnp.sin(pos_y[:, :, 0::2]), jnp.cos(pos_y[:, :, 1::2])),
                      axis=3).reshape(h, w, -1)
    pos = jnp.concatenate([pos_y, pos_x], axis=2)     # [h, w, hidden]
    return jnp.transpose(pos, (2, 0, 1))[None]        # [1, hidden, h, w]


# ---------------------------------------------------------------------------
# Parameters: canonical weights + one-time packing into the kernel layout.
# ---------------------------------------------------------------------------
def init_params():
    keys = jax.random.split(jax.random.PRNGKey(1), 8)
    s = 0.05
    w_backbone = s * jax.random.normal(keys[0], (PATCH_DIM, C_BACKBONE), jnp.float32)
    b_backbone = s * jax.random.normal(keys[1], (C_BACKBONE,), jnp.float32)
    w_input_proj = s * jax.random.normal(keys[2], (C_BACKBONE, HIDDEN), jnp.float32)
    b_input_proj = s * jax.random.normal(keys[3], (HIDDEN,), jnp.float32)
    w_proprio = s * jax.random.normal(keys[4], (STATE_DIM, HIDDEN), jnp.float32)
    b_proprio = s * jax.random.normal(keys[5], (HIDDEN,), jnp.float32)
    w_latent = s * jax.random.normal(keys[6], (LATENT_DIM, HIDDEN), jnp.float32)
    b_latent = s * jax.random.normal(keys[7], (HIDDEN,), jnp.float32)

    # --- one-time packing for the lane-dense kernel --------------------------
    # zero-pad K (48 -> 64), then block-diagonal replicate PACK times so the
    # packed matmul equals PACK independent per-token matmuls (zeros are exact
    # in bf16, so no extra rounding vs. casting the weights directly).
    eye = jnp.eye(PACK, dtype=jnp.float32)
    w1_pad = jnp.pad(w_backbone, ((0, K_PAD - PATCH_DIM), (0, 0)))      # (64, 32)
    w1_bd = jnp.kron(eye, w1_pad).astype(jnp.bfloat16)                   # (256, 128)
    w2_bd = jnp.kron(eye, w_input_proj).astype(jnp.bfloat16)             # (128, 128)
    b1_t = jnp.tile(b_backbone.reshape(1, -1), (1, PACK))                # (1, 128) f32
    b2_t = jnp.tile(b_input_proj.reshape(1, -1), (1, PACK))              # (1, 128) f32

    return {
        "w1_bd": w1_bd, "b1_t": b1_t, "w2_bd": w2_bd, "b2_t": b2_t,
        "w_proprio": w_proprio, "b_proprio": b_proprio,
        "w_latent": w_latent, "b_latent": b_latent,
    }


# ---------------------------------------------------------------------------
# act_encoder forward
# ---------------------------------------------------------------------------
@jax.jit
def act_encoder_forward(params, qpos, camera_imgs):
    b = qpos.shape[0]
    nc = camera_imgs.shape[1]
    ntok = b * nc * FEAT_H * FEAT_W

    # --- patchify, pad K to 64, pack 4 tokens per 128-lane row --------------
    patches = patchify(camera_imgs)                                  # [ntok, 48] f32
    patches = jnp.pad(patches, ((0, 0), (0, K_PAD - PATCH_DIM)))     # [ntok, 64]
    patches_packed = patches.reshape(ntok // PACK,
                                     PACK * K_PAD).astype(jnp.bfloat16)  # [16, 256]

    # --- fused backbone-conv + ReLU + 1x1 input_proj (single Pallas launch) --
    src_packed = encoder_fused(patches_packed,
                               params["w1_bd"], params["b1_t"],
                               params["w2_bd"], params["b2_t"])      # [16, 128] f32

    # unpack lane-packed tokens back to [tokens, HIDDEN] (row-major reshape)
    src_tok = src_packed.reshape(ntok, HIDDEN)

    # NCHW view + fold cameras into width (torch.cat(..., axis=3)) — built only
    # here at the module's external API boundary; downstream fused consumers
    # should take src_tok ([tokens, HIDDEN], lane-friendly) directly.
    src = src_tok.reshape(b, nc, FEAT_H, FEAT_W, HIDDEN)
    src = jnp.transpose(src, (0, 4, 2, 1, 3)).reshape(b, HIDDEN, FEAT_H, nc * FEAT_W)

    # --- sinusoidal position embedding (constant-folds under jit) -----------
    pos_single = sine_pos_embed(FEAT_H, FEAT_W, HIDDEN)              # [1, hidden, h, w]
    pos = jnp.concatenate([pos_single] * nc, axis=3)                 # [1, hidden, h, nc*w]

    # --- latent_input: latent_out_proj(zeros) == bias broadcast (exact) -----
    latent_input = jnp.broadcast_to(params["b_latent"], (b, HIDDEN))

    # --- proprio projection: tiny [2,8]@[8,32] GEMM, plain JAX (per review) --
    proprio_input = qpos @ params["w_proprio"] + params["b_proprio"]

    return src, pos, latent_input, proprio_input


if __name__ == "__main__":
    B = 2
    k_in = jax.random.split(jax.random.PRNGKey(0), 2)
    qpos = jax.random.normal(k_in[0], (B, STATE_DIM), jnp.float32)
    camera_imgs = jax.random.normal(k_in[1], (B, NUM_CAMS, C_IN, IMG_H, IMG_W), jnp.float32)

    params = init_params()
    src, pos, latent_input, proprio_input = act_encoder_forward(params, qpos, camera_imgs)
    jax.block_until_ready((src, pos, latent_input, proprio_input))

    assert src.shape == (B, HIDDEN, FEAT_H, NUM_CAMS * FEAT_W)
    assert pos.shape == (1, HIDDEN, FEAT_H, NUM_CAMS * FEAT_W)
    assert latent_input.shape == (B, HIDDEN)
    assert proprio_input.shape == (B, HIDDEN)
    print("KERNEL_OK")
</pallas_src>

<mosaic_0001>
module attributes {stable_mosaic.version = 11 : i64} {
  func.func @_encoder_kernel(%arg0: memref<16x256xbf16, #tpu.memory_space<vmem>>, %arg1: memref<256x128xbf16, #tpu.memory_space<vmem>>, %arg2: memref<1x128xf32, #tpu.memory_space<vmem>>, %arg3: memref<128x128xbf16, #tpu.memory_space<vmem>>, %arg4: memref<1x128xf32, #tpu.memory_space<vmem>>, %arg5: memref<16x128xf32, #tpu.memory_space<vmem>>) attributes {dimension_semantics = [], scalar_prefetch = 0 : i64, scratch_operands = 0 : i64, tpu.core_type = #tpu.core_type<tc>} {
    %c0 = arith.constant 0 : index
    %c0_0 = arith.constant 0 : index
    %0 = vector.load %arg0[%c0, %c0_0] : memref<16x256xbf16, #tpu.memory_space<vmem>>, vector<16x256xbf16>
    %c0_1 = arith.constant 0 : index
    %c0_2 = arith.constant 0 : index
    %1 = vector.load %arg1[%c0_1, %c0_2] : memref<256x128xbf16, #tpu.memory_space<vmem>>, vector<256x128xbf16>
    %cst = arith.constant dense<0.000000e+00> : vector<16x128xf32>
    %2 = tpu.matmul %0, %1, %cst {dimension_numbers = #tpu.dot_dimension_numbers<[1], [0], [0], [1], [0, 0, 1, 1], [], []>} : vector<16x256xbf16>, vector<256x128xbf16>, vector<16x128xf32> -> vector<16x128xf32>
    %c0_3 = arith.constant 0 : index
    %c0_4 = arith.constant 0 : index
    %3 = vector.load %arg2[%c0_3, %c0_4] : memref<1x128xf32, #tpu.memory_space<vmem>>, vector<1x128xf32>
    %4 = vector.broadcast %3 : vector<1x128xf32> to vector<16x128xf32>
    %5 = arith.addf %2, %4 : vector<16x128xf32>
    %cst_5 = arith.constant 0.000000e+00 : f32
    %6 = vector.broadcast %cst_5 : f32 to vector<16x128xf32>
    %7 = arith.maximumf %5, %6 : vector<16x128xf32>
    %8 = arith.truncf %7 : vector<16x128xf32> to vector<16x128xbf16>
    %c0_6 = arith.constant 0 : index
    %c0_7 = arith.constant 0 : index
    %9 = vector.load %arg3[%c0_6, %c0_7] : memref<128x128xbf16, #tpu.memory_space<vmem>>, vector<128x128xbf16>
    %cst_8 = arith.constant dense<0.000000e+00> : vector<16x128xf32>
    %10 = tpu.matmul %8, %9, %cst_8 {dimension_numbers = #tpu.dot_dimension_numbers<[1], [0], [0], [1], [0, 0, 1, 1], [], []>} : vector<16x128xbf16>, vector<128x128xbf16>, vector<16x128xf32> -> vector<16x128xf32>
    %c0_9 = arith.constant 0 : index
    %c0_10 = arith.constant 0 : index
    %11 = vector.load %arg4[%c0_9, %c0_10] : memref<1x128xf32, #tpu.memory_space<vmem>>, vector<1x128xf32>
    %12 = vector.broadcast %11 : vector<1x128xf32> to vector<16x128xf32>
    %13 = arith.addf %10, %12 : vector<16x128xf32>
    %c0_11 = arith.constant 0 : index
    %c0_12 = arith.constant 0 : index
    %14 = vector.load %arg5[%c0_11, %c0_12] : memref<16x128xf32, #tpu.memory_space<vmem>>, vector<16x128xf32>
    tpu.vector_store %arg5[%c0_11, %c0_12], %13 {strides = array<i32>} : memref<16x128xf32, #tpu.memory_space<vmem>>, vector<16x128xf32>,
    return
  }
}

</mosaic_0001>

<llo_original>
// kernel: act_encoder_forward.1
$region0: #{act_encoder_forward.1}
  #allocation0 [shape = 'u32[]', space=smem, size = 0x4, offset = 0x4, fixed_abs, tag = 'smem constant byte address 0x4 - core index']
  #allocation1 [shape = 'u32[144,128]{1,0:T(1,128)}', space=vmem, size = 0x12000, scoped, tag = 'internal scratch']
  %s0 = inlined_call_operand.vmem [shape: bf16[16,256], index: 0, kind: input, shape index: {}]
  %s1 = inlined_call_operand.vmem [shape: bf16[256,128], index: 1, kind: input, shape index: {}]
  %s2 = inlined_call_operand.vmem [shape: f32[1,128], index: 2, kind: input, shape index: {}]
  %s3 = inlined_call_operand.vmem [shape: bf16[128,128], index: 3, kind: input, shape index: {}]
  %s4 = inlined_call_operand.vmem [shape: f32[1,128], index: 4, kind: input, shape index: {}]
  %s5 = inlined_call_operand.vmem [shape: f32[16,128], index: 5, kind: output, shape index: {}]
  %s6 = sld [smem:[#allocation0]]
  $region30: #{act_encoder_forward.1} parent=0
    _
  %s8 = ssub.s32 1, %s6
  %s9 = scalar_select 0, %s8, %s6
  // Predicated region
  $region2: #{act_encoder_forward.1} parent=0 // pred_check
    _
  $region3: #{act_encoder_forward.1} parent=0 // pred_check_branch
    %11 = sbr.rel (0) target = $region5
  $region4: #{act_encoder_forward.1} parent=0 // pred_region
    _
  $region5: #{act_encoder_forward.1} parent=0 // pred_fallthru
    _
  // Predicated region
  $region6: #{act_encoder_forward.1} parent=0 // pred_check
    _
  $region7: #{act_encoder_forward.1} parent=0 // pred_check_branch
    %13 = sbr.rel (0) target = $region9
  $region8: #{act_encoder_forward.1} parent=0 // pred_region
    _
  $region9: #{act_encoder_forward.1} parent=0 // pred_fallthru
    _
  // Predicated region
  $region10: #{act_encoder_forward.1} parent=0 // pred_check
    _
  $region11: #{act_encoder_forward.1} parent=0 // pred_check_branch
    %15 = sbr.rel (0) target = $region13
  $region12: #{act_encoder_forward.1} parent=0 // pred_region
    _
  $region13: #{act_encoder_forward.1} parent=0 // pred_fallthru
    _
  // Predicated region
  $region14: #{act_encoder_forward.1} parent=0 // pred_check
    _
  $region15: #{act_encoder_forward.1} parent=0 // pred_check_branch
    %17 = sbr.rel (0) target = $region17
  $region16: #{act_encoder_forward.1} parent=0 // pred_region
    _
  $region17: #{act_encoder_forward.1} parent=0 // pred_fallthru
    _
  // Predicated region
  $region18: #{act_encoder_forward.1} parent=0 // pred_check
    _
  $region19: #{act_encoder_forward.1} parent=0 // pred_check_branch
    %19 = sbr.rel (0) target = $region21
  $region20: #{act_encoder_forward.1} parent=0 // pred_region
    _
  $region21: #{act_encoder_forward.1} parent=0 // pred_fallthru
    _
  %v21 = vld [vmem:[%s0] sm:$0xff]
  %v22 = vld [vmem:[%s0 + $0x8] sm:$0xff]
  %v23 = vld [vmem:[%s1] sm:$0xf]
  %v24 = vld [vmem:[%s1 + $0x4] sm:$0xf]
  %v25 = vld [vmem:[%s1 + $0x8] sm:$0xf]
  %v26 = vld [vmem:[%s1 + $0xc] sm:$0xf]
  %v27 = vld [vmem:[%s1 + $0x10] sm:$0xf]
  %v28 = vld [vmem:[%s1 + $0x14] sm:$0xf]
  %v29 = vld [vmem:[%s1 + $0x18] sm:$0xf]
  %v30 = vld [vmem:[%s1 + $0x1c] sm:$0xf]
  %v31 = vld [vmem:[%s1 + $0x20] sm:$0xf]
  %v32 = vld [vmem:[%s1 + $0x24] sm:$0xf]
  %v33 = vld [vmem:[%s1 + $0x28] sm:$0xf]
  %v34 = vld [vmem:[%s1 + $0x2c] sm:$0xf]
  %v35 = vld [vmem:[%s1 + $0x30] sm:$0xf]
  %v36 = vld [vmem:[%s1 + $0x34] sm:$0xf]
  %v37 = vld [vmem:[%s1 + $0x38] sm:$0xf]
  %v38 = vld [vmem:[%s1 + $0x3c] sm:$0xf]
  %v39 = vld [vmem:[%s1 + $0x40] sm:$0xf]
  %v40 = vld [vmem:[%s1 + $0x44] sm:$0xf]
  %v41 = vld [vmem:[%s1 + $0x48] sm:$0xf]
  %v42 = vld [vmem:[%s1 + $0x4c] sm:$0xf]
  %v43 = vld [vmem:[%s1 + $0x50] sm:$0xf]
  %v44 = vld [vmem:[%s1 + $0x54] sm:$0xf]
  %v45 = vld [vmem:[%s1 + $0x58] sm:$0xf]
  %v46 = vld [vmem:[%s1 + $0x5c] sm:$0xf]
  %v47 = vld [vmem:[%s1 + $0x60] sm:$0xf]
  %v48 = vld [vmem:[%s1 + $0x64] sm:$0xf]
  %v49 = vld [vmem:[%s1 + $0x68] sm:$0xf]
  %v50 = vld [vmem:[%s1 + $0x6c] sm:$0xf]
  %v51 = vld [vmem:[%s1 + $0x70] sm:$0xf]
  %v52 = vld [vmem:[%s1 + $0x74] sm:$0xf]
  %v53 = vld [vmem:[%s1 + $0x78] sm:$0xf]
  %v54 = vld [vmem:[%s1 + $0x7c] sm:$0xf]
  %v55 = vld [vmem:[%s2] sm:$0x1]
  %v57 = vlaneseq
  %v58 = vshrl.u32 %v57, 7
  %v59 = vsub.s32 0, %v58
  %v60 = vrot.slane %v55, %v59
  %v64 = vunpack.c.l.b16 %v21
  %v65 = vunpack.c.h.b16 %v21
  %v66 = vunpack.c.l.b16 %v22
  %v67 = vunpack.c.h.b16 %v22
  %v68 = vpack.c.b16 %v66, %v64
  %v69 = vpack.c.b16 %v67, %v65
  %v104 = vunpack.c.l.b16 %v23
  %v105 = vunpack.c.l.b16 %v24
  %v106 = vunpack.c.l.b16 %v25
  %v107 = vunpack.c.l.b16 %v26
  %v108 = vunpack.c.l.b16 %v27
  %v109 = vunpack.c.l.b16 %v28
  %v110 = vunpack.c.l.b16 %v29
  %v111 = vunpack.c.l.b16 %v30
  %v112 = vunpack.c.l.b16 %v31
  %v113 = vunpack.c.l.b16 %v32
  %v114 = vunpack.c.l.b16 %v33
  %v115 = vunpack.c.l.b16 %v34
  %v116 = vunpack.c.l.b16 %v35
  %v117 = vunpack.c.l.b16 %v36
  %v118 = vunpack.c.l.b16 %v37
  %v119 = vunpack.c.l.b16 %v38
  %v120 = vunpack.c.l.b16 %v39
  %v121 = vunpack.c.l.b16 %v40
  %v122 = vunpack.c.l.b16 %v41
  %v123 = vunpack.c.l.b16 %v42
  %v124 = vunpack.c.l.b16 %v43
  %v125 = vunpack.c.l.b16 %v44
  %v126 = vunpack.c.l.b16 %v45
  %v127 = vunpack.c.l.b16 %v46
  %v128 = vunpack.c.l.b16 %v47
  %v129 = vunpack.c.l.b16 %v48
  %v130 = vunpack.c.l.b16 %v49
  %v131 = vunpack.c.l.b16 %v50
  %v132 = vunpack.c.l.b16 %v51
  %v133 = vunpack.c.l.b16 %v52
  %v134 = vunpack.c.l.b16 %v53
  %v135 = vunpack.c.l.b16 %v54
  %v136 = vpack.c.b16 %v105, %v104
  %v137 = vpack.c.b16 %v107, %v106
  %v138 = vpack.c.b16 %v109, %v108
  %v139 = vpack.c.b16 %v111, %v110
  %v140 = vpack.c.b16 %v113, %v112
  %v141 = vpack.c.b16 %v115, %v114
  %v142 = vpack.c.b16 %v117, %v116
  %v143 = vpack.c.b16 %v119, %v118
  %v144 = vpack.c.b16 %v121, %v120
  %v145 = vpack.c.b16 %v123, %v122
  %v146 = vpack.c.b16 %v125, %v124
  %v147 = vpack.c.b16 %v127, %v126
  %v148 = vpack.c.b16 %v129, %v128
  %v149 = vpack.c.b16 %v131, %v130
  %v150 = vpack.c.b16 %v133, %v132
  %v151 = vpack.c.b16 %v135, %v134
  %168 = vmatprep.subr.bf16.mxu0 0
  %169 = vmatpush1.bf16.msra.mxu0 %v136
  %170 = vmatprep.subr.bf16.mxu0 0
  %171 = vmatpush1.bf16.msra.mxu0 %v137
  %172 = vmatprep.subr.bf16.mxu0 0
  %173 = vmatpush1.bf16.msra.mxu0 %v138
  %174 = vmatprep.subr.bf16.mxu0 0
  %175 = vmatpush1.bf16.msra.mxu0 %v139
  %176 = vmatprep.subr.bf16.mxu0 0
  %177 = vmatpush1.bf16.msra.mxu0 %v140
  %178 = vmatprep.subr.bf16.mxu0 0
  %179 = vmatpush1.bf16.msra.mxu0 %v141
  %180 = vmatprep.subr.bf16.mxu0 0
  %181 = vmatpush1.bf16.msra.mxu0 %v142
  %182 = vmatprep.subr.bf16.mxu0 0
  %183 = vmatpush1.bf16.msra.mxu0 %v143
  %184 = vmatprep.subr.bf16.mxu0 0
  %185 = vmatpush1.bf16.msra.mxu0 %v144
  %186 = vmatprep.subr.bf16.mxu0 0
  %187 = vmatpush1.bf16.msra.mxu0 %v145
  %188 = vmatprep.subr.bf16.mxu0 0
  %189 = vmatpush1.bf16.msra.mxu0 %v146
  %190 = vmatprep.subr.bf16.mxu0 0
  %191 = vmatpush1.bf16.msra.mxu0 %v147
  %192 = vmatprep.subr.bf16.mxu0 0
  %193 = vmatpush1.bf16.msra.mxu0 %v148
  %194 = vmatprep.subr.bf16.mxu0 0
  %195 = vmatpush1.bf16.msra.mxu0 %v149
  %196 = vmatprep.subr.bf16.mxu0 0
  %197 = vmatpush1.bf16.msra.mxu0 %v150
  %198 = vmatprep.subr.bf16.mxu0 0
  %199 = vmatpush1.bf16.msra.mxu0 %v151
  %200 = vmatprep.mubr.bf16.mxu0 %v69
  %201 = vmatmul.mubr.bf16.gmra.mrb[0].mxu0 %v68
  %v202 = vpop.f32.mrb[0].mxu0
  %v203 = vadd.f32 %v60, %v202
  %v204 = vpop.f32.mrb[0].mxu0
  %v205 = vpop.f32.mrb[0].mxu0
  %v206 = vadd.f32 %v60, %v205
  %v207 = vpop.f32.mrb[0].mxu0
  %208 = vdwg.mxu0
  %v209 = vmax.f32 %v203, 0.0
  %v210 = vmax.f32 %v206, 0.0
  %v211 = vpack.c.bf16 %v210, %v209
  %v212 = vld [vmem:[%s3] sm:$0xf]
  %v213 = vld [vmem:[%s3 + $0x4] sm:$0xf]
  %v214 = vld [vmem:[%s3 + $0x8] sm:$0xf]
  %v215 = vld [vmem:[%s3 + $0xc] sm:$0xf]
  %v216 = vld [vmem:[%s3 + $0x10] sm:$0xf]
  %v217 = vld [vmem:[%s3 + $0x14] sm:$0xf]
  %v218 = vld [vmem:[%s3 + $0x18] sm:$0xf]
  %v219 = vld [vmem:[%s3 + $0x1c] sm:$0xf]
  %v220 = vld [vmem:[%s3 + $0x20] sm:$0xf]
  %v221 = vld [vmem:[%s3 + $0x24] sm:$0xf]
  %v222 = vld [vmem:[%s3 + $0x28] sm:$0xf]
  %v223 = vld [vmem:[%s3 + $0x2c] sm:$0xf]
  %v224 = vld [vmem:[%s3 + $0x30] sm:$0xf]
  %v225 = vld [vmem:[%s3 + $0x34] sm:$0xf]
  %v226 = vld [vmem:[%s3 + $0x38] sm:$0xf]
  %v227 = vld [vmem:[%s3 + $0x3c] sm:$0xf]
  %v228 = vld [vmem:[%s4] sm:$0x1]
  %v230 = vlaneseq
  %v231 = vshrl.u32 %v230, 7
  %v232 = vsub.s32 0, %v231
  %v233 = vrot.slane %v228, %v232
  %v251 = vunpack.c.l.b16 %v212
  %v252 = vunpack.c.l.b16 %v213
  %v253 = vunpack.c.l.b16 %v214
  %v254 = vunpack.c.l.b16 %v215
  %v255 = vunpack.c.l.b16 %v216
  %v256 = vunpack.c.l.b16 %v217
  %v257 = vunpack.c.l.b16 %v218
  %v258 = vunpack.c.l.b16 %v219
  %v259 = vunpack.c.l.b16 %v220
  %v260 = vunpack.c.l.b16 %v221
  %v261 = vunpack.c.l.b16 %v222
  %v262 = vunpack.c.l.b16 %v223
  %v263 = vunpack.c.l.b16 %v224
  %v264 = vunpack.c.l.b16 %v225
  %v265 = vunpack.c.l.b16 %v226
  %v266 = vunpack.c.l.b16 %v227
  %v267 = vpack.c.b16 %v252, %v251
  %v268 = vpack.c.b16 %v254, %v253
  %v269 = vpack.c.b16 %v256, %v255
  %v270 = vpack.c.b16 %v258, %v257
  %v271 = vpack.c.b16 %v260, %v259
  %v272 = vpack.c.b16 %v262, %v261
  %v273 = vpack.c.b16 %v264, %v263
  %v274 = vpack.c.b16 %v266, %v265
  %283 = vmatprep.subr.bf16.mxu0 0
  %284 = vmatpush1.bf16.msra.mxu0 %v267
  %285 = vmatprep.subr.bf16.mxu0 0
  %286 = vmatpush1.bf16.msra.mxu0 %v268
  %287 = vmatprep.subr.bf16.mxu0 0
  %288 = vmatpush1.bf16.msra.mxu0 %v269
  %289 = vmatprep.subr.bf16.mxu0 0
  %290 = vmatpush1.bf16.msra.mxu0 %v270
  %291 = vmatprep.subr.bf16.mxu0 0
  %292 = vmatpush1.bf16.msra.mxu0 %v271
  %293 = vmatprep.subr.bf16.mxu0 0
  %294 = vmatpush1.bf16.msra.mxu0 %v272
  %295 = vmatprep.subr.bf16.mxu0 0
  %296 = vmatpush1.bf16.msra.mxu0 %v273
  %297 = vmatprep.subr.bf16.mxu0 0
  %298 = vmatpush1.bf16.msra.mxu0 %v274
  %299 = vmatprep.subr.bf16.mxu0 0
  %300 = vmatpush1.bf16.msra.mxu0 0
  %301 = vmatprep.subr.bf16.mxu0 0
  %302 = vmatpush1.bf16.msra.mxu0 0
  %303 = vmatprep.subr.bf16.mxu0 0
  %304 = vmatpush1.bf16.msra.mxu0 0
  %305 = vmatprep.subr.bf16.mxu0 0
  %306 = vmatpush1.bf16.msra.mxu0 0
  %307 = vmatprep.subr.bf16.mxu0 0
  %308 = vmatpush1.bf16.msra.mxu0 0
  %309 = vmatprep.subr.bf16.mxu0 0
  %310 = vmatpush1.bf16.msra.mxu0 0
  %311 = vmatprep.subr.bf16.mxu0 0
  %312 = vmatpush1.bf16.msra.mxu0 0
  %313 = vmatprep.subr.bf16.mxu0 0
  %314 = vmatpush1.bf16.msra.mxu0 0
  %315 = vmatprep.mubr.bf16.mxu0 0
  %316 = vmatmul.mubr.bf16.gmra.mrb[0].mxu0 %v211
  %v317 = vpop.f32.mrb[0].mxu0
  %v318 = vadd.f32 %v233, %v317
  %v319 = vpop.f32.mrb[0].mxu0
  %v320 = vpop.f32.mrb[0].mxu0
  %v321 = vadd.f32 %v233, %v320
  %v322 = vpop.f32.mrb[0].mxu0
  %323 = vdwg.mxu0
  %324 = vst [vmem:[%s5] sm:$0xff] %v318
  %325 = vst [vmem:[%s5 + $0x8] sm:$0xff] %v321
  // Predicated region
  $region22: #{act_encoder_forward.1} parent=0 // pred_check
    _
  $region23: #{act_encoder_forward.1} parent=0 // pred_check_branch
    %327 = sbr.rel (0) target = $region25
  $region24: #{act_encoder_forward.1} parent=0 // pred_region
    _
  $region25: #{act_encoder_forward.1} parent=0 // pred_fallthru
    _
  // Predicated region
  $region26: #{act_encoder_forward.1} parent=0 // pred_check
    _
  $region27: #{act_encoder_forward.1} parent=0 // pred_check_branch
    %329 = sbr.rel (0) target = $region29
  $region28: #{act_encoder_forward.1} parent=0 // pred_region
    _
  $region29: #{act_encoder_forward.1} parent=0 // pred_fallthru
    _

</llo_original>
